<compile_context>
chip_gen: v5e
topology: v5e:2x2
jax: 0.10.0
libtpu: 0.0.40
codegen_flags: <defaults>
</compile_context>

<pallas_src>
import functools

import jax
import jax.numpy as jnp
from jax import lax
from jax.experimental import pallas as pl
from jax.experimental.pallas import tpu as pltpu


def _rmsnorm_kernel(x_ref, scale_ref, o_ref, *, eps):
    """x_ref: [tm, Hp]; scale_ref: [1, Hp] (f32); o_ref: [tm, Hp]."""
    x32 = x_ref[...].astype(jnp.float32)                      # [tm, Hp]
    sumsq = jnp.sum(x32 * x32, axis=-1, keepdims=True)        # [tm, 1] lane reduce
    # 1 / max(||x||, eps) == rsqrt(max(sumsq, eps^2))  (sqrt is monotone);
    # rsqrt runs on the EUP, keeping the VPU slot for the per-element muls.
    inv = lax.rsqrt(jnp.maximum(sumsq, eps * eps))            # [tm, 1]
    scale = scale_ref[...]                                     # [1, Hp] f32
    # Re-read x for the product so the reduce-time f32 copy can die early.
    y = x_ref[...].astype(jnp.float32) * scale * inv
    o_ref[...] = y.astype(o_ref.dtype)


def _vmem_budget():
    """(vmem_limit_bytes, tile_budget_bytes) sized per TPU generation."""
    try:
        phys = int(pltpu.get_tpu_info().vmem_capacity_bytes)
    except Exception:
        phys = 64 << 20                         # conservative (v7x-sized)
    # v5e/v6e (128 MiB phys) -> 64 MiB scoped limit; v7x (64 MiB) -> ~38 MiB.
    vmem_limit = min(64 << 20, int(phys * 0.6))
    tile_budget = int(vmem_limit * 0.7)         # headroom for compiler scratch
    return vmem_limit, tile_budget


def _pick_row_tile(N, H, dtype, tile_budget_bytes):
    """Largest sublane-aligned row tile that fits the pipeline budget."""
    itemsize = jnp.dtype(dtype).itemsize
    # Native sublane packing: f32 -> 8, bf16/f16 -> 16, int8/fp8 -> 32.
    sublane = {1: 32, 2: 16}.get(itemsize, 8)
    # Per-row bytes: double-buffered in + out tiles, plus in-kernel f32 temps.
    per_row = 4 * H * itemsize + 8 * H
    cap = (tile_budget_bytes // per_row) // sublane * sublane
    cap = int(max(sublane, min(cap, 2048)))     # diminishing returns past ~2K rows
    if N <= min(cap, 1024):
        return N                                # single full-extent block (always legal)
    # Large N: ensure the parallel grid has >= 2 steps so both TensorCores on
    # v7x get work, while staying within the VMEM-derived cap.
    half = max(sublane, (N // 2) // sublane * sublane)
    return max(sublane, min(cap, half))


def rmsnorm_forward(inputs, learnable_scale, *, eps=1e-8):
    """inputs: [..., H] (e.g. cramming seq-first [S, B, H]). Returns same shape."""
    orig_shape = inputs.shape
    H = orig_shape[-1]
    N = 1
    for d in orig_shape[:-1]:
        N *= d
    x2 = inputs.reshape(N, H)                   # contiguous view, no copy

    # Lane-dense stores: pad H up to a multiple of 128 (zeros do not change the
    # sum of squares; padded output columns are sliced off below).
    Hp = ((H + 127) // 128) * 128
    scale2 = learnable_scale.astype(jnp.float32).reshape(1, H)
    if Hp != H:
        x2 = jnp.pad(x2, ((0, 0), (0, Hp - H)))
        scale2 = jnp.pad(scale2, ((0, 0), (0, Hp - H)))

    vmem_limit, tile_budget = _vmem_budget()
    tm = _pick_row_tile(N, Hp, inputs.dtype, tile_budget)
    grid = (pl.cdiv(N, tm),)

    kernel = functools.partial(_rmsnorm_kernel, eps=float(eps))

    out = pl.pallas_call(
        kernel,
        out_shape=jax.ShapeDtypeStruct((N, Hp), inputs.dtype),
        grid_spec=pltpu.PrefetchScalarGridSpec(
            num_scalar_prefetch=0,
            grid=grid,
            in_specs=[
                pl.BlockSpec((tm, Hp), lambda i: (i, 0)),   # x row block
                pl.BlockSpec((1, Hp), lambda i: (0, 0)),    # learnable scale (resident)
            ],
            out_specs=pl.BlockSpec((tm, Hp), lambda i: (i, 0)),
        ),
        compiler_params=pltpu.CompilerParams(
            dimension_semantics=("parallel",),              # shard row blocks across TCs
            vmem_limit_bytes=vmem_limit,
        ),
    )(x2, scale2)

    if Hp != H:
        out = out[:, :H]
    return out.reshape(orig_shape)


def _reference_forward(inputs, learnable_scale, *, eps=1e-8):
    """Pure-JAX reference mirroring the PyTorch RMSNorm semantics."""
    norm = jnp.linalg.norm(inputs.astype(jnp.float32), axis=-1, keepdims=True)
    return (inputs.astype(jnp.float32) * learnable_scale
            / jnp.maximum(norm, eps)).astype(inputs.dtype)


if __name__ == "__main__":
    SEQ, BATCH, HIDDEN = 8, 2, 32
    EPS = 1e-8

    key = jax.random.PRNGKey(0)
    k_x, k_s = jax.random.split(key)

    # cramming init is ones(hidden) ** (-0.5) == ones; perturb it so the
    # learnable scale actually matters in the check.
    learnable_scale = 1.0 + 0.1 * jax.random.normal(k_s, (HIDDEN,), jnp.float32)

    # Seq-first hidden states per cramming LAYOUT "[S B H]".
    inputs = jax.random.normal(k_x, (SEQ, BATCH, HIDDEN), jnp.float32)
    # Exercise the eps clamp path: one all-zero token (norm == 0 -> clamp to eps).
    inputs = inputs.at[0, 0, :].set(0.0)

    out = rmsnorm_forward(inputs, learnable_scale, eps=EPS)
    out = jax.block_until_ready(out)

    ref = _reference_forward(inputs, learnable_scale, eps=EPS)

    assert out.shape == inputs.shape
    assert jnp.allclose(out, ref, atol=1e-5, rtol=1e-5), (
        f"max abs err {jnp.max(jnp.abs(out - ref))}")
    print("KERNEL_OK")
</pallas_src>

<mosaic_0001>
module attributes {stable_mosaic.version = 11 : i64} {
  func.func @_rmsnorm_kernel(%arg0: i32, %arg1: memref<16x128xf32, #tpu.memory_space<vmem>>, %arg2: memref<1x128xf32, #tpu.memory_space<vmem>>, %arg3: memref<16x128xf32, #tpu.memory_space<vmem>>) attributes {dimension_semantics = [#tpu.dimension_semantics<parallel>], iteration_bounds = array<i64: 1>, scalar_prefetch = 0 : i64, scratch_operands = 0 : i64, tpu.core_type = #tpu.core_type<tc>, window_params = [{transform_indices = @transform_0, window_bounds = array<i64: 16, 128>}, {pipeline_mode = #tpu.pipeline_mode<synchronous>, transform_indices = @transform_1, window_bounds = array<i64: 1, 128>}, {transform_indices = @transform_2, window_bounds = array<i64: 16, 128>}]} {
    %c0 = arith.constant 0 : index
    %c0_0 = arith.constant 0 : index
    %0 = vector.load %arg1[%c0, %c0_0] : memref<16x128xf32, #tpu.memory_space<vmem>>, vector<16x128xf32>
    %1 = arith.mulf %0, %0 : vector<16x128xf32>
    %cst = arith.constant dense<0.000000e+00> : vector<16xf32>
    %2 = vector.multi_reduction <add>, %1, %cst [1] : vector<16x128xf32> to vector<16xf32>
    %3 = vector.shape_cast %2 : vector<16xf32> to vector<16x1xf32>
    %cst_1 = arith.constant 1.000000e-16 : f32
    %4 = vector.broadcast %cst_1 : f32 to vector<16x1xf32>
    %5 = arith.maximumf %3, %4 : vector<16x1xf32>
    %6 = math.rsqrt %5 : vector<16x1xf32>
    %c0_2 = arith.constant 0 : index
    %c0_3 = arith.constant 0 : index
    %7 = vector.load %arg2[%c0_2, %c0_3] : memref<1x128xf32, #tpu.memory_space<vmem>>, vector<1x128xf32>
    %c0_4 = arith.constant 0 : index
    %c0_5 = arith.constant 0 : index
    %8 = vector.load %arg1[%c0_4, %c0_5] : memref<16x128xf32, #tpu.memory_space<vmem>>, vector<16x128xf32>
    %9 = vector.broadcast %7 : vector<1x128xf32> to vector<16x128xf32>
    %10 = arith.mulf %8, %9 : vector<16x128xf32>
    %11 = vector.broadcast %6 : vector<16x1xf32> to vector<16x128xf32>
    %12 = arith.mulf %10, %11 : vector<16x128xf32>
    %c0_6 = arith.constant 0 : index
    %c0_7 = arith.constant 0 : index
    %13 = vector.load %arg3[%c0_6, %c0_7] : memref<16x128xf32, #tpu.memory_space<vmem>>, vector<16x128xf32>
    tpu.vector_store %arg3[%c0_6, %c0_7], %12 {strides = array<i32>} : memref<16x128xf32, #tpu.memory_space<vmem>>, vector<16x128xf32>,
    return
  }
  func.func @transform_0(%arg0: i32) -> (i32, i32) {
    %c0_i32 = arith.constant 0 : i32
    %c0_i32_0 = arith.constant 0 : i32
    return %arg0, %c0_i32 : i32, i32
  }
  func.func @transform_1(%arg0: i32) -> (i32, i32) {
    %c0_i32 = arith.constant 0 : i32
    %c0_i32_0 = arith.constant 0 : i32
    %c0_i32_1 = arith.constant 0 : i32
    return %c0_i32, %c0_i32_0 : i32, i32
  }
  func.func @transform_2(%arg0: i32) -> (i32, i32) {
    %c0_i32 = arith.constant 0 : i32
    %c0_i32_0 = arith.constant 0 : i32
    return %arg0, %c0_i32 : i32, i32
  }
}

</mosaic_0001>

<llo_original>
// kernel: tpu_custom_call.1
$region0: #{tpu_custom_call.1}
  #allocation0 [shape = 'u32[]', space=smem, size = 0x4, offset = 0x4, fixed_abs, tag = 'smem constant byte address 0x4 - core index']
  #allocation1 [shape = 'u32[72,128]{1,0:T(1,128)}', space=vmem, size = 0x9000, scoped, tag = 'internal scratch']
  %s0 = inlined_call_operand.hbm [shape: f32[16,128], index: 0, kind: input, shape index: {}]
  %s1 = inlined_call_operand.hbm [shape: f32[1,128], index: 1, kind: input, shape index: {}]
  %s2 = inlined_call_operand.hbm [shape: f32[16,128], index: 2, kind: output, shape index: {}]
  %s3 = sld [smem:[#allocation0]]
  $region26: #{tpu_custom_call.1} parent=0
    _
  %s5 = ssub.s32 1, %s3
  %s6 = scalar_select 0, %s5, %s3
  $region1: #{tpu_custom_call.1} parent=0
    #allocation2 [shape = 'u8[8192]{0}', space=vmem, size = 0x2000, scoped, tag = 'input window, operand 0, single buffered']
    #allocation3 [shape = 's32[1]{0}', space=sflag, size = 0x4, scoped, tag = 'scoped memory for tpu_custom_call.1']
    #allocation4 [shape = 's32[1]{0}', space=sflag, size = 0x4, scoped, tag = 'scoped memory for tpu_custom_call.1']
    #allocation5 [shape = 'u8[512]{0}', space=vmem, size = 0x400, scoped, tag = 'input window, operand 1, single buffered']
    #allocation6 [shape = 's32[1]{0}', space=sflag, size = 0x4, scoped, tag = 'scoped memory for tpu_custom_call.1']
    #allocation7 [shape = 'u8[8192]{0}', space=vmem, size = 0x2000, scoped, tag = 'output window, operand 0, single buffered']
    %7 = vsyncpa [#allocation3], 0
    %8 = vsyncpa [#allocation6], 0
    %9 = vsyncpa [#allocation4], 0
    // Predicated region
    $region2: #{tpu_custom_call.1} parent=1 // pred_check
      _
    $region3: #{tpu_custom_call.1} parent=1 // pred_check_branch
      %11 = sbr.rel (0) target = $region5
    $region4: #{tpu_custom_call.1} parent=1 // pred_region
      %13 = vsyncadd [#allocation3], 0
      %s14 = sshll.u32 %s0, 4
      %s15 = int_to_ptr.hbm [resolvable:$true] %s14
      %s16 = sshll.u32 [#allocation2], 4
      %s17 = int_to_ptr.vmem [resolvable:$true] %s16
      %22 = dma.hbm_to_vmem [thread:$0]  %s15, 256, %s17, [#allocation3], 128, 128, 8
    $region5: #{tpu_custom_call.1} parent=1 // pred_fallthru
      _
    // Predicated region
    $region6: #{tpu_custom_call.1} parent=1 // pred_check
      _
    $region7: #{tpu_custom_call.1} parent=1 // pred_check_branch
      %24 = sbr.rel (0) target = $region9
    $region8: #{tpu_custom_call.1} parent=1 // pred_region
      %26 = vsyncadd [#allocation6], 0
      %s28 = sshll.u32 %s1, 4
      %s29 = int_to_ptr.hbm [resolvable:$true] %s28
      %s30 = sshll.u32 [#allocation5], 4
      %s31 = int_to_ptr.vmem [resolvable:$true] %s30
      %33 = dma.hbm_to_vmem [thread:$0]  %s29, 16, %s31, [#allocation6]
    $region9: #{tpu_custom_call.1} parent=1 // pred_fallthru
      _
    // Predicated region
    $region10: #{tpu_custom_call.1} parent=1 // pred_check
      _
    $region11: #{tpu_custom_call.1} parent=1 // pred_check_branch
      %35 = sbr.rel (0) target = $region13
    $region12: #{tpu_custom_call.1} parent=1 // pred_region
      %37 = dma.done [#allocation3], 256
    $region13: #{tpu_custom_call.1} parent=1 // pred_fallthru
      _
    // Predicated region
    $region14: #{tpu_custom_call.1} parent=1 // pred_check
      _
    $region15: #{tpu_custom_call.1} parent=1 // pred_check_branch
      %39 = sbr.rel (0) target = $region17
    $region16: #{tpu_custom_call.1} parent=1 // pred_region
      %41 = dma.done [#allocation6], 16
    $region17: #{tpu_custom_call.1} parent=1 // pred_fallthru
      _
    %v42 = vld [vmem:[#allocation2] sm:$0xff]
    %v43 = vld [vmem:[#allocation2 + $0x8] sm:$0xff]
    %v44 = vmul.f32 %v42, %v42
    %v45 = vmul.f32 %v43, %v43
    %46 = vadd.xlane.f32.xlu0 %v44
    %v47 = vpop.xlane.xlu0 %46
    %48 = vadd.xlane.f32.xlu0 %v45
    %v49 = vpop.xlane.xlu0 %48
    %v50 = vmax.f32 %v47, 1e-16
    %v51 = vmax.f32 %v49, 1e-16
    %v52 = vrsqrt.pop %v50
    %v53 = vmul.f32 %v52, %v50
    %v54 = vmul.f32 %v53, %v52
    %v55 = vmul.f32 0.5, %v54
    %v56 = vsub.f32 1.5, %v55
    %v57 = vmul.f32 %v52, %v56
    %vm58 = vweird.f32 %v50
    %vm59 = vweird.f32 %v52
    %vm60 = vmor %vm58, %vm59
    %v61 = vsel %vm60, %v52, %v57
    %v62 = vrsqrt.pop %v51
    %v63 = vmul.f32 %v62, %v51
    %v64 = vmul.f32 %v63, %v62
    %v65 = vmul.f32 0.5, %v64
    %v66 = vsub.f32 1.5, %v65
    %v67 = vmul.f32 %v62, %v66
    %vm68 = vweird.f32 %v51
    %vm69 = vweird.f32 %v62
    %vm70 = vmor %vm68, %vm69
    %v71 = vsel %vm70, %v62, %v67
    %v72 = vld [vmem:[#allocation5] sm:$0x1]
    %v74 = vperm.slane %v72, 0
    %v76 = vmul.f32 %v42, %v74
    %v77 = vmul.f32 %v43, %v74
    %v78 = vmul.f32 %v76, %v61
    %v79 = vmul.f32 %v77, %v71
    %80 = vst [vmem:[#allocation7] sm:$0xff] %v78
    %81 = vst [vmem:[#allocation7 + $0x8] sm:$0xff] %v79
    // Predicated region
    $region18: #{tpu_custom_call.1} parent=1 // pred_check
      _
    $region19: #{tpu_custom_call.1} parent=1 // pred_check_branch
      %83 = sbr.rel (0) target = $region21
    $region20: #{tpu_custom_call.1} parent=1 // pred_region
      %85 = vsyncadd [#allocation4], 0
      %s86 = sshll.u32 [#allocation7], 4
      %s87 = int_to_ptr.vmem [resolvable:$true] %s86
      %s88 = sshll.u32 %s2, 4
      %s89 = int_to_ptr.hbm [resolvable:$true] %s88
      %94 = dma.vmem_to_hbm [thread:$0]  %s87, 256, %s89, [#allocation4], 128, 128, 8
    $region21: #{tpu_custom_call.1} parent=1 // pred_fallthru
      _
    // Predicated region
    $region22: #{tpu_custom_call.1} parent=1 // pred_check
      _
    $region23: #{tpu_custom_call.1} parent=1 // pred_check_branch
      %96 = sbr.rel (0) target = $region25
    $region24: #{tpu_custom_call.1} parent=1 // pred_region
      %98 = dma.done [#allocation4], 256
    $region25: #{tpu_custom_call.1} parent=1 // pred_fallthru
      _
    %99 = vsyncpa [#allocation3], 1
    %100 = vsyncpa [#allocation6], 1
    %101 = vsyncpa [#allocation4], 1

</llo_original>
